<compile_context>
chip_gen: v5e
topology: v5e:2x2
jax: 0.10.0
libtpu: 0.0.40
codegen_flags: <defaults>
</compile_context>

<pallas_src>
import functools

import jax
import jax.numpy as jnp
from jax.experimental import pallas as pl
from jax.experimental.pallas import tpu as pltpu

_MiB = 1024 * 1024


def _vmem_capacity_bytes():
    """Physical VMEM of the attached TPU; conservative (v7x-sized) fallback."""
    try:
        return int(pltpu.get_tpu_info().vmem_capacity_bytes)
    except Exception:
        return 64 * _MiB


def _budgets():
    cap = _vmem_capacity_bytes()
    # v7x (64 MiB): limit 48 MiB.  v5e/v6e (128 MiB): limit 96 MiB.
    vmem_limit = min((cap * 3) // 4, 100 * _MiB)
    max_fused = max(vmem_limit - 8 * _MiB, 8 * _MiB)
    tile_bytes = min(12 * _MiB, max(vmem_limit // 8, 1 * _MiB))
    return vmem_limit, max_fused, tile_bytes


# ---------------------------------------------------------------------------
# Fused path: one batch element's whole (1, C, HW) slab per grid step.
# ---------------------------------------------------------------------------
def _fused_kernel(x_ref, wt_ref, b_ref, o_ref, *, inv_hw):
    # f32 cast is confined to the reduction; the output multiply stays in the
    # native dtype (no full-slab f32 temp reused across both).
    mean = jnp.sum(x_ref[...].astype(jnp.float32), axis=2) * inv_hw        # (1, C_in)
    z = jnp.dot(mean, wt_ref[...],
                preferred_element_type=jnp.float32) + b_ref[...]           # (1, C_out)
    attn = jax.nn.sigmoid(z).astype(o_ref.dtype)                           # (1, C_out)
    o_ref[...] = x_ref[...] * attn[:, :, None]


# ---------------------------------------------------------------------------
# Tiled path, pass 0: per-(B, C) partial spatial sums.
# grid = (n_par, n_inner); outer axis "parallel" (megacore), inner "arbitrary"
# (resident accumulator).  Ragged / duplicated boundary tiles are masked using
# the *intended* global lane offset, so clamped block indices contribute zero.
# ---------------------------------------------------------------------------
def _reduce_kernel(x_ref, psum_ref, *, thw, n_inner, hw, needs_mask):
    p = pl.program_id(0)
    h = pl.program_id(1)

    @pl.when(h == 0)
    def _():
        psum_ref[...] = jnp.zeros_like(psum_ref)

    x = x_ref[...].astype(jnp.float32)                                     # (B, C, thw)
    if needs_mask:
        start = (p * n_inner + h) * thw
        lane = jax.lax.broadcasted_iota(jnp.int32, (1, 1, thw), 2)
        x = jnp.where((start + lane) < hw, x, 0.0)
    psum_ref[...] += jnp.sum(x, axis=2)[None, :, :]                        # (1, B, C)


# ---------------------------------------------------------------------------
# Tiled path, pass 1: pure load-mul-store stream (attn precomputed, native dtype).
# ---------------------------------------------------------------------------
def _scale_kernel(x_ref, attn_ref, o_ref):
    o_ref[...] = x_ref[...] * attn_ref[...][:, :, None]


def attention_refinement_module(x_nchw, w, b, *,
                                max_fused_bytes=None,
                                target_tile_bytes=None):
    """x_nchw: (B, C_in, H, W); w: (C_out, C_in) [Conv2d 1x1 weight squeezed];
    b: (C_out,).  Returns x * sigmoid(conv1x1(avgpool(x))), shape (B, C_out, H, W)."""
    B, C_in, H, W = x_nchw.shape
    C_out = w.shape[0]
    assert C_out == C_in, "broadcast multiply requires out_channels == in_channels"
    HW = H * W
    itemsize = jnp.dtype(x_nchw.dtype).itemsize

    vmem_limit, default_fused, default_tile = _budgets()
    if max_fused_bytes is None:
        max_fused_bytes = default_fused
    if target_tile_bytes is None:
        target_tile_bytes = default_tile

    wt = w.astype(jnp.float32).T.reshape(C_in, C_out)    # (C_in, C_out)
    b2 = b.astype(jnp.float32).reshape(1, C_out)         # (1, C_out)
    inv_hw = 1.0 / float(HW)

    x_flat = x_nchw.reshape(B, C_in, HW)                 # metadata-only, no HBM copy

    # Fused eligibility: 2x double-buffered (1,C,HW) in + out + f32 reduce temp.
    blk_bytes = C_in * HW * itemsize
    fused_footprint = 4 * blk_bytes + C_in * HW * 4

    if fused_footprint <= max_fused_bytes:
        # ---------------- fused single-pass path (1 read + 1 write of x) ----------------
        out_flat = pl.pallas_call(
            functools.partial(_fused_kernel, inv_hw=inv_hw),
            out_shape=jax.ShapeDtypeStruct((B, C_out, HW), x_nchw.dtype),
            grid_spec=pltpu.PrefetchScalarGridSpec(
                num_scalar_prefetch=0,
                grid=(B,),
                in_specs=[
                    pl.BlockSpec((1, C_in, HW), lambda bidx: (bidx, 0, 0)),
                    pl.BlockSpec((C_in, C_out), lambda bidx: (0, 0)),
                    pl.BlockSpec((1, C_out), lambda bidx: (0, 0)),
                ],
                out_specs=pl.BlockSpec((1, C_out, HW), lambda bidx: (bidx, 0, 0)),
            ),
            compiler_params=pltpu.CompilerParams(
                dimension_semantics=("parallel",),
                vmem_limit_bytes=vmem_limit,
            ),
        )(x_flat, wt, b2)
        return out_flat.reshape(B, C_out, H, W)

    # ---------------- tiled two-pass path ----------------
    bytes_per_lane = B * C_in * itemsize
    target_lanes = max(target_tile_bytes // bytes_per_lane, 128)
    if target_lanes >= HW:
        thw = HW                                  # full-extent block: exempt from 128-lane rule
    else:
        thw = (target_lanes // 128) * 128         # lane-dense tile
    n_hw = -(-HW // thw)
    n_par = 2 if n_hw >= 2 else 1                 # split the streaming reduce across v7x's 2 TCs
    n_inner = -(-n_hw // n_par)
    needs_mask = (HW % thw != 0) or (n_par * n_inner != n_hw)
    clamp = n_hw - 1

    # Pass 0: partial per-(B, C) sums, one partial row per parallel chunk.
    partials = pl.pallas_call(
        functools.partial(_reduce_kernel, thw=thw, n_inner=n_inner,
                          hw=HW, needs_mask=needs_mask),
        out_shape=jax.ShapeDtypeStruct((n_par, B, C_in), jnp.float32),
        grid_spec=pltpu.PrefetchScalarGridSpec(
            num_scalar_prefetch=0,
            grid=(n_par, n_inner),
            in_specs=[pl.BlockSpec(
                (B, C_in, thw),
                lambda p, h: (0, 0, jnp.minimum(p * n_inner + h, clamp)))],
            out_specs=pl.BlockSpec((1, B, C_in), lambda p, h: (p, 0, 0)),
        ),
        compiler_params=pltpu.CompilerParams(
            dimension_semantics=("parallel", "arbitrary"),
            vmem_limit_bytes=vmem_limit,
        ),
    )(x_flat)

    # attn = sigmoid(conv1x1(mean)): tiny (B, C) op, hoisted out of the per-tile loop.
    mean = jnp.sum(partials, axis=0) * inv_hw                               # (B, C_in) f32
    attn = jax.nn.sigmoid(mean @ wt + b2).astype(x_nchw.dtype)              # (B, C_out)

    # Pass 1: channel-wise rescale; boundary-block writeback is clipped by Pallas.
    out_flat = pl.pallas_call(
        _scale_kernel,
        out_shape=jax.ShapeDtypeStruct((B, C_out, HW), x_nchw.dtype),
        grid_spec=pltpu.PrefetchScalarGridSpec(
            num_scalar_prefetch=0,
            grid=(n_hw,),
            in_specs=[
                pl.BlockSpec((B, C_in, thw), lambda h: (0, 0, h)),
                pl.BlockSpec((B, C_out), lambda h: (0, 0)),
            ],
            out_specs=pl.BlockSpec((B, C_out, thw), lambda h: (0, 0, h)),
        ),
        compiler_params=pltpu.CompilerParams(
            dimension_semantics=("parallel",),
            vmem_limit_bytes=vmem_limit,
        ),
    )(x_flat, attn)
    return out_flat.reshape(B, C_out, H, W)


def _reference(x_nchw, w, b):
    mean = jnp.mean(x_nchw.astype(jnp.float32), axis=(2, 3))               # (B, C_in)
    z = mean @ w.astype(jnp.float32).T + b.astype(jnp.float32)             # (B, C_out)
    attn = jax.nn.sigmoid(z)[:, :, None, None]
    return (x_nchw * attn).astype(x_nchw.dtype)


if __name__ == "__main__":
    key = jax.random.PRNGKey(0)
    kx, kw, kb = jax.random.split(key, 3)

    # Small demo shapes consistent with the module (in_channels == out_channels).
    B, C, H, W = 2, 8, 16, 16
    x = jax.random.normal(kx, (B, C, H, W), dtype=jnp.float32)
    w = jax.random.normal(kw, (C, C), dtype=jnp.float32) * 0.1   # Conv2d 1x1 weight (C_out, C_in)
    b = jax.random.normal(kb, (C,), dtype=jnp.float32) * 0.1
    ref = _reference(x, w, b)

    # 1) fused single-pass path (per-batch slab fits in VMEM).
    out_fused = jax.block_until_ready(attention_refinement_module(x, w, b))
    assert out_fused.shape == (B, C, H, W)
    assert jnp.allclose(out_fused, ref, atol=1e-5, rtol=1e-5)

    # 2) tiled two-pass path, forced, 128-lane HW tiles (HW divisible -> no masking).
    out_tiled = jax.block_until_ready(
        attention_refinement_module(x, w, b, max_fused_bytes=0,
                                    target_tile_bytes=B * C * 128 * 4))
    assert jnp.allclose(out_tiled, ref, atol=1e-5, rtol=1e-5)

    # 3) ragged spatial size (H*W = 100) through the fused path (full-extent block, no pad).
    x2 = jax.random.normal(kx, (B, C, 10, 10), dtype=jnp.float32)
    ref2 = _reference(x2, w, b)
    out2 = jax.block_until_ready(attention_refinement_module(x2, w, b))
    assert jnp.allclose(out2, ref2, atol=1e-5, rtol=1e-5)

    # 4) ragged spatial size (H*W = 300) through the tiled path:
    #    thw = 128 -> partial last tile (masked reduce, clipped writeback) and one
    #    clamped/duplicated grid step that must contribute zero.
    x3 = jax.random.normal(kx, (B, C, 15, 20), dtype=jnp.float32)
    ref3 = _reference(x3, w, b)
    out3 = jax.block_until_ready(
        attention_refinement_module(x3, w, b, max_fused_bytes=0,
                                    target_tile_bytes=B * C * 128 * 4))
    assert jnp.allclose(out3, ref3, atol=1e-5, rtol=1e-5)

    print("KERNEL_OK")
</pallas_src>

<mosaic_0001>
module attributes {stable_mosaic.version = 11 : i64} {
  func.func @_fused_kernel(%arg0: i32, %arg1: memref<1x8x256xf32, #tpu.memory_space<vmem>>, %arg2: memref<8x8xf32, #tpu.memory_space<vmem>>, %arg3: memref<1x8xf32, #tpu.memory_space<vmem>>, %arg4: memref<1x8x256xf32, #tpu.memory_space<vmem>>) attributes {dimension_semantics = [#tpu.dimension_semantics<parallel>], iteration_bounds = array<i64: 2>, scalar_prefetch = 0 : i64, scratch_operands = 0 : i64, tpu.core_type = #tpu.core_type<tc>, window_params = [{transform_indices = @transform_0, window_bounds = array<i64: 1, 8, 256>}, {pipeline_mode = #tpu.pipeline_mode<synchronous>, transform_indices = @transform_1, window_bounds = array<i64: 8, 8>}, {pipeline_mode = #tpu.pipeline_mode<synchronous>, transform_indices = @transform_2, window_bounds = array<i64: 1, 8>}, {transform_indices = @transform_3, window_bounds = array<i64: 1, 8, 256>}]} {
    %c0 = arith.constant 0 : index
    %c0_0 = arith.constant 0 : index
    %c0_1 = arith.constant 0 : index
    %0 = vector.load %arg1[%c0, %c0_0, %c0_1] : memref<1x8x256xf32, #tpu.memory_space<vmem>>, vector<1x8x256xf32>
    %cst = arith.constant dense<0.000000e+00> : vector<1x8xf32>
    %1 = vector.multi_reduction <add>, %0, %cst [2] : vector<1x8x256xf32> to vector<1x8xf32>
    %cst_2 = arith.constant 3.906250e-03 : f32
    %2 = vector.broadcast %cst_2 : f32 to vector<1x8xf32>
    %3 = arith.mulf %1, %2 : vector<1x8xf32>
    %c0_3 = arith.constant 0 : index
    %c0_4 = arith.constant 0 : index
    %4 = vector.load %arg2[%c0_3, %c0_4] : memref<8x8xf32, #tpu.memory_space<vmem>>, vector<8x8xf32>
    %cst_5 = arith.constant dense<0.000000e+00> : vector<1x8xf32>
    %5 = tpu.matmul %3, %4, %cst_5 {dimension_numbers = #tpu.dot_dimension_numbers<[1], [0], [0], [1], [0, 0, 1, 1], [], []>} : vector<1x8xf32>, vector<8x8xf32>, vector<1x8xf32> -> vector<1x8xf32>
    %c0_6 = arith.constant 0 : index
    %c0_7 = arith.constant 0 : index
    %6 = vector.load %arg3[%c0_6, %c0_7] : memref<1x8xf32, #tpu.memory_space<vmem>>, vector<1x8xf32>
    %7 = arith.addf %5, %6 : vector<1x8xf32>
    %8 = arith.negf %7 : vector<1x8xf32>
    %9 = math.exp %8 : vector<1x8xf32>
    %cst_8 = arith.constant 1.000000e+00 : f32
    %10 = vector.broadcast %cst_8 : f32 to vector<1x8xf32>
    %11 = arith.addf %10, %9 : vector<1x8xf32>
    %12 = arith.divf %10, %11 : vector<1x8xf32>
    %c0_9 = arith.constant 0 : index
    %c0_10 = arith.constant 0 : index
    %c0_11 = arith.constant 0 : index
    %13 = vector.load %arg1[%c0_9, %c0_10, %c0_11] : memref<1x8x256xf32, #tpu.memory_space<vmem>>, vector<1x8x256xf32>
    %14 = vector.shape_cast %12 : vector<1x8xf32> to vector<1x8x1xf32>
    %15 = vector.broadcast %14 : vector<1x8x1xf32> to vector<1x8x256xf32>
    %16 = arith.mulf %13, %15 : vector<1x8x256xf32>
    %c0_12 = arith.constant 0 : index
    %c0_13 = arith.constant 0 : index
    %c0_14 = arith.constant 0 : index
    %17 = vector.load %arg4[%c0_12, %c0_13, %c0_14] : memref<1x8x256xf32, #tpu.memory_space<vmem>>, vector<1x8x256xf32>
    tpu.vector_store %arg4[%c0_12, %c0_13, %c0_14], %16 {strides = array<i32>} : memref<1x8x256xf32, #tpu.memory_space<vmem>>, vector<1x8x256xf32>,
    return
  }
  func.func @transform_0(%arg0: i32) -> (i32, i32, i32) {
    %c0_i32 = arith.constant 0 : i32
    %c0_i32_0 = arith.constant 0 : i32
    %c0_i32_1 = arith.constant 0 : i32
    return %arg0, %c0_i32, %c0_i32_0 : i32, i32, i32
  }
  func.func @transform_1(%arg0: i32) -> (i32, i32) {
    %c0_i32 = arith.constant 0 : i32
    %c0_i32_0 = arith.constant 0 : i32
    %c0_i32_1 = arith.constant 0 : i32
    return %c0_i32, %c0_i32_0 : i32, i32
  }
  func.func @transform_2(%arg0: i32) -> (i32, i32) {
    %c0_i32 = arith.constant 0 : i32
    %c0_i32_0 = arith.constant 0 : i32
    %c0_i32_1 = arith.constant 0 : i32
    return %c0_i32, %c0_i32_0 : i32, i32
  }
  func.func @transform_3(%arg0: i32) -> (i32, i32, i32) {
    %c0_i32 = arith.constant 0 : i32
    %c0_i32_0 = arith.constant 0 : i32
    %c0_i32_1 = arith.constant 0 : i32
    return %arg0, %c0_i32, %c0_i32_0 : i32, i32, i32
  }
}

</mosaic_0001>

<llo_original>
// kernel: tpu_custom_call.1
$region0: #{tpu_custom_call.1}
  #allocation0 [shape = 'u32[]', space=smem, size = 0x4, offset = 0x4, fixed_abs, tag = 'smem constant byte address 0x4 - core index']
  #allocation1 [shape = 'u32[72,128]{1,0:T(1,128)}', space=vmem, size = 0x9000, scoped, tag = 'internal scratch']
  %s0 = inlined_call_operand.hbm [shape: f32[2,8,256], index: 0, kind: input, shape index: {}]
  %s1 = inlined_call_operand.hbm [shape: f32[8,8], index: 1, kind: input, shape index: {}]
  %s2 = inlined_call_operand.vmem [shape: f32[1,8], index: 2, kind: input, shape index: {}]
  %s3 = inlined_call_operand.hbm [shape: f32[2,8,256], index: 3, kind: output, shape index: {}]
  %s4 = sld [smem:[#allocation0]]
  $region53: #{tpu_custom_call.1} parent=0
    _
  %s6 = ssub.s32 1, %s4
  %s7 = scalar_select 0, %s6, %s4
  $region1: #{tpu_custom_call.1} parent=0
    #allocation2 [shape = 'u8[16384]{0}', space=vmem, size = 0x4000, scoped, tag = 'input window, operand 0']
    #allocation3 [shape = 's32[2]{0}', space=sflag, size = 0x8, scoped, tag = 'scoped memory for tpu_custom_call.1']
    #allocation4 [shape = 's32[2]{0}', space=sflag, size = 0x8, scoped, tag = 'scoped memory for tpu_custom_call.1']
    #allocation5 [shape = 'u8[4096]{0}', space=vmem, size = 0x1000, scoped, tag = 'input window, operand 1, single buffered']
    #allocation6 [shape = 's32[1]{0}', space=sflag, size = 0x4, scoped, tag = 'scoped memory for tpu_custom_call.1']
    #allocation7 [shape = 'u8[16384]{0}', space=vmem, size = 0x4000, scoped, tag = 'output window, operand 0']
    %8 = vsyncpa [#allocation3], 0
    %s9 = scalar_lea.sflag [#allocation3], 1
    %10 = vsyncpa %s9, 0
    %11 = vsyncpa [#allocation6], 0
    %12 = vsyncpa [#allocation4], 0
    %s13 = scalar_lea.sflag [#allocation4], 1
    %14 = vsyncpa %s13, 0
    loop: start=0, step=1, limit=4
    $region2: #{tpu_custom_call.1} parent=1 // loop_pre_header
      _
    $region3: #{tpu_custom_call.1} parent=1 // loop_header
      %s16 = sphi 0, %s20
      %p17 = scmp.ge.s32.totalorder %s16, 4
      %s26 = sphi 0, %s28
      %s29 = sphi 0, %s26
      %s30 = sphi 0, %s29
      %s46 = sphi 0, %s30
      %s50 = sphi 0, %s50
      %s52 = sphi 0, %s50
      %s53 = sphi 0, %s52
      %s67 = sphi 0, %s53
      %s71 = sphi 0, %s71
      %s73 = sphi 0, %s71
      %s74 = sphi 0, %s73
      %s88 = sphi 0, %s74
      %s94 = sphi 0, %s96
      %s97 = sphi 0, %s94
      %s98 = sphi 0, %s97
      %s114 = sphi 0, %s98
    $region4: #{tpu_custom_call.1} parent=1 // loop_header_branch
      %19 = sbr.rel (%p17) target = $region8
    $region5: #{tpu_custom_call.1} parent=1 // loop_body
      %s21 = ssub.s32 %s16, 1
      %s22 = ssub.s32 %s16, 2
      %s23 = sadd.s32 %s16, 1
      %s24 = ssub.s32 %s16, %s23
      %p25 = scmp.eq.s32.totalorder %s24, 0
      %s27 = sadd.s32 %s26, 1
      %s28 = scalar_select %p25, %s26, %s27
      %p31 = pneg %p25
      %p32 = scmp.eq.s32.totalorder %s16, 1
      %p33 = por %p31, %p32
      %p34 = scmp.ne.s32.totalorder %s26, %s29
      %p35 = scmp.eq.s32.totalorder %s16, 0
      %p36 = por %p34, %p35
      %p37 = scmp.ne.s32.totalorder %s26, %s29
      %p38 = scmp.eq.s32.totalorder %s21, 1
      %p39 = por %p37, %p38
      %p40 = scmp.ne.s32.totalorder %s29, %s30
      %p41 = scmp.eq.s32.totalorder %s21, 0
      %p42 = por %p40, %p41
      %p43 = scmp.ne.s32.totalorder %s29, %s30
      %p44 = scmp.eq.s32.totalorder %s22, 1
      %p45 = por %p43, %p44
      %p47 = scmp.ne.s32.totalorder %s30, %s46
      %p48 = scmp.eq.s32.totalorder %s22, 0
      %p49 = por %p47, %p48
      %s51 = sadd.s32 %s50, 1
      %p54 = scmp.eq.s32.totalorder %s16, 1
      %p55 = scmp.ne.s32.totalorder %s50, %s52
      %p56 = scmp.eq.s32.totalorder %s16, 0
      %p57 = por %p55, %p56
      %p58 = scmp.ne.s32.totalorder %s50, %s52
      %p59 = scmp.eq.s32.totalorder %s21, 1
      %p60 = por %p58, %p59
      %p61 = scmp.ne.s32.totalorder %s52, %s53
      %p62 = scmp.eq.s32.totalorder %s21, 0
      %p63 = por %p61, %p62
      %p64 = scmp.ne.s32.totalorder %s52, %s53
      %p65 = scmp.eq.s32.totalorder %s22, 1
      %p66 = por %p64, %p65
      %p68 = scmp.ne.s32.totalorder %s53, %s67
      %p69 = scmp.eq.s32.totalorder %s22, 0
      %p70 = por %p68, %p69
      %s72 = sadd.s32 %s71, 1
      %p75 = scmp.eq.s32.totalorder %s16, 1
      %p76 = scmp.ne.s32.totalorder %s71, %s73
      %p77 = scmp.eq.s32.totalorder %s16, 0
      %p78 = por %p76, %p77
      %p79 = scmp.ne.s32.totalorder %s71, %s73
      %p80 = scmp.eq.s32.totalorder %s21, 1
      %p81 = por %p79, %p80
      %p82 = scmp.ne.s32.totalorder %s73, %s74
      %p83 = scmp.eq.s32.totalorder %s21, 0
      %p84 = por %p82, %p83
      %p85 = scmp.ne.s32.totalorder %s73, %s74
      %p86 = scmp.eq.s32.totalorder %s22, 1
      %p87 = por %p85, %p86
      %p89 = scmp.ne.s32.totalorder %s74, %s88
      %p90 = scmp.eq.s32.totalorder %s22, 0
      %p91 = por %p89, %p90
      %s92 = ssub.s32 %s16, %s23
      %p93 = scmp.eq.s32.totalorder %s92, 0
      %s95 = sadd.s32 %s94, 1
      %s96 = scalar_select %p93, %s94, %s95
      %p99 = pneg %p93
      %p100 = scmp.eq.s32.totalorder %s16, 1
      %p101 = por %p99, %p100
      %p102 = scmp.ne.s32.totalorder %s94, %s97
      %p103 = scmp.eq.s32.totalorder %s16, 0
      %p104 = por %p102, %p103
      %p105 = scmp.ne.s32.totalorder %s94, %s97
      %p106 = scmp.eq.s32.totalorder %s21, 1
      %p107 = por %p105, %p106
      %p108 = scmp.ne.s32.totalorder %s97, %s98
      %p109 = scmp.eq.s32.totalorder %s21, 0
      %p110 = por %p108, %p109
      %p111 = scmp.ne.s32.totalorder %s97, %s98
      %p112 = scmp.eq.s32.totalorder %s22, 1
      %p113 = por %p111, %p112
      %p115 = scmp.ne.s32.totalorder %s98, %s114
      %p116 = scmp.eq.s32.totalorder %s22, 0
      %p117 = por %p115, %p116
      %p118 = scmp.le.s32.totalorder 1, %s16
      %p119 = scmp.lt.s32.totalorder %s16, 3
      %p120 = pnand %p118, %p119
      %p121 = pneg %p120
      // Predicated region
      $region9: #{tpu_custom_call.1} parent=5 // pred_check
        _
      $region10: #{tpu_custom_call.1} parent=5 // pred_check_branch
        %123 = sbr.rel (%p120) target = $region12
      $region11: #{tpu_custom_call.1} parent=5 // pred_region
        %s124 = ssub.s32 %s16, 1
        // Predicated region
        $region13: #{tpu_custom_call.1} parent=11 // pred_check
          %p125 = pneg %p63
        $region14: #{tpu_custom_call.1} parent=11 // pred_check_branch
          %127 = sbr.rel (%p125) target = $region16
        $region15: #{tpu_custom_call.1} parent=11 // pred_region
          %129 = vsyncadd [#allocation6], 0
          %s131 = sshll.u32 %s1, 4
          %s132 = int_to_ptr.hbm [resolvable:$true] %s131
          %s133 = sshll.u32 [#allocation5], 4
          %s134 = int_to_ptr.vmem [resolvable:$true] %s133
          %136 = dma.hbm_to_vmem [thread:$0]  %s132, 128, %s134, [#allocation6]
        $region16: #{tpu_custom_call.1} parent=11 // pred_fallthru
          _
        // Predicated region
        $region17: #{tpu_custom_call.1} parent=11 // pred_check
          %p137 = pneg %p84
        $region18: #{tpu_custom_call.1} parent=11 // pred_check_branch
          %139 = sbr.rel (%p137) target = $region20
        $region19: #{tpu_custom_call.1} parent=11 // pred_region
          _
        $region20: #{tpu_custom_call.1} parent=11 // pred_fallthru
          _
      $region12: #{tpu_custom_call.1} parent=5 // pred_fallthru
        _
      %p140 = scmp.lt.s32.totalorder %s16, 2
      // Predicated region
      $region21: #{tpu_custom_call.1} parent=5 // pred_check
        %p141 = pneg %p140
      $region22: #{tpu_custom_call.1} parent=5 // pred_check_branch
        %143 = sbr.rel (%p141) target = $region24
      $region23: #{tpu_custom_call.1} parent=5 // pred_region
        // Predicated region
        $region25: #{tpu_custom_call.1} parent=23 // pred_check
          %p144 = pneg %p36
        $region26: #{tpu_custom_call.1} parent=23 // pred_check_branch
          %146 = sbr.rel (%p144) target = $region28
        $region27: #{tpu_custom_call.1} parent=23 // pred_region
          %s147 = sand.u32 %s26, 1
          %s148 = scalar_lea.sflag [#allocation3], %s147
          %s149 = sand.u32 %s26, 1
          %s150 = smul.addr %s149, 16
          %s151 = scalar_lea.vmem [#allocation2], %s150
          %153 = vsyncadd %s148, 0
          %s154 = smul.addr %s16, 2
          %s155 = smul.addr %s154, 8
          %s156 = scalar_lea.hbm %s0, %s155
          %s158 = sshll.u32 %s156, 4
          %s159 = int_to_ptr.hbm [resolvable:$true] %s158
          %s160 = sshll.u32 %s151, 4
          %s161 = int_to_ptr.vmem [resolvable:$true] %s160
          %163 = dma.hbm_to_vmem [thread:$0]  %s159, 256, %s161, %s148
        $region28: #{tpu_custom_call.1} parent=23 // pred_fallthru
          _
      $region24: #{tpu_custom_call.1} parent=5 // pred_fallthru
        _
      %p164 = scmp.le.s32.totalorder 1, %s16
      %p165 = scmp.lt.s32.totalorder %s16, 3
      %p166 = pnand %p164, %p165
      %p167 = pneg %p166
      // Predicated region
      $region29: #{tpu_custom_call.1} parent=5 // pred_check
        _
      $region30: #{tpu_custom_call.1} parent=5 // pred_check_branch
        %169 = sbr.rel (%p166) target = $region32
      $region31: #{tpu_custom_call.1} parent=5 // pred_region
        %s170 = ssub.s32 %s16, 1
        %s171 = sand.u32 %s29, 1
        %s172 = scalar_lea.sflag [#allocation3], %s171
        %s173 = sand.u32 %s29, 1
        %s174 = smul.addr %s173, 16
        %s175 = scalar_lea.vmem [#allocation2], %s174
        // Predicated region
        $region33: #{tpu_custom_call.1} parent=31 // pred_check
          %p176 = pneg %p42
        $region34: #{tpu_custom_call.1} parent=31 // pred_check_branch
          %178 = sbr.rel (%p176) target = $region36
        $region35: #{tpu_custom_call.1} parent=31 // pred_region
          %180 = dma.done %s172, 256
        $region36: #{tpu_custom_call.1} parent=31 // pred_fallthru
          _
        // Predicated region
        $region37: #{tpu_custom_call.1} parent=31 // pred_check
          %p181 = pneg %p63
        $region38: #{tpu_custom_call.1} parent=31 // pred_check_branch
          %183 = sbr.rel (%p181) target = $region40
        $region39: #{tpu_custom_call.1} parent=31 // pred_region
          %185 = dma.done [#allocation6], 128
        $region40: #{tpu_custom_call.1} parent=31 // pred_fallthru
          _
        %s186 = sand.u32 %s29, 1
        %s187 = scalar_lea.sflag [#allocation3], %s186
        %s188 = sand.u32 %s29, 1
        %s189 = smul.addr %s188, 16
        %s190 = scalar_lea.vmem [#allocation2], %s189
        %p191 = pneg %p42
        %p192 = pneg %p39
        %p193 = pneg %p63
        %p194 = pneg %p60
        %p195 = pneg %p84
        %p196 = pneg %p81
        %p197 = pneg %p110
        %p198 = pneg %p107
        %s199 = sand.u32 %s97, 1
        %s200 = scalar_lea.sflag [#allocation4], %s199
        %s201 = sand.u32 %s97, 1
        %s202 = smul.addr %s201, 16
        %s203 = scalar_lea.vmem [#allocation7], %s202
        %v204 = vld [vmem:[%s175] sm:$0xff]
        %v205 = vld [vmem:[%s175 + $0x8] sm:$0xff]
        %v206 = vadd.f32 %v204, %v205
        %207 = vadd.xlane.f32.xlu0 %v206
        %v208 = vpop.xlane.xlu0 %207
        %v209 = vmul.f32 %v208, 0.00390625
        %v210 = vld [vmem:[#allocation5] sm:$0xff]
        %v211 = vld [vmem:[%s2] sm:$0x1]
        %v213 = vlaneseq
        %v214 = vand.u32 %v213, 127
        %v215 = vperm.slane %v209, %v214
        %vm216 = vcmask 64512
        %v217 = vsel %vm216, %v215, 0
        %219 = vmatpush.msra.mxu0 0.0
        %220 = vmatpush.msra.mxu0 0.0
        %221 = vmatpush.msra.mxu0 0.0
        %222 = vmatpush.msra.mxu0 0.0
        %223 = vmatpush.msra.mxu0 0.0
        %224 = vmatpush.msra.mxu0 0.0
        %225 = vmatpush.msra.mxu0 0.0
        %226 = vmatpush.msra.mxu0 0.0
        %227 = vmatpush.msra.mxu0 0.0
        %228 = vmatpush.msra.mxu0 0.0
        %229 = vmatpush.msra.mxu0 0.0
        %230 = vmatpush.msra.mxu0 0.0
        %231 = vmatpush.msra.mxu0 0.0
        %232 = vmatpush.msra.mxu0 0.0
        %233 = vmatpush.msra.mxu0 0.0
        %234 = vmatpush.msra.mxu0 %v210
        %235 = vmatmul.f32.gmra.mxu0 %v217
        %v236 = vpop.f32.mrf.mxu0
        %v237 = vadd.f32 %v211, %v236
        %238 = vdwg.mxu0
        %v239 = vxor.u32 %v237, 2147483648
        %v240 = vmul.f32 %v239, 1.442695
        %v241 = vpow.pop %v240
        %v242 = vadd.f32 %v241, 1.0
        %v243 = vrcp.pop %v242
        %v244 = vmul.f32 %v242, %v243
        %v245 = vsub.f32 1.0, %v244
        %v246 = vmul.f32 %v243, %v245
        %v247 = vadd.f32 %v243, %v246
        %vm248 = vweird.f32 %v242
        %vm249 = vweird.f32 %v243
        %vm250 = vmor %vm248, %vm249
        %v251 = vsel %vm250, %v243, %v247
        %v252 = vand.u32 2147483647, %v242
        %vm253 = vcmp.eq.f32.partialorder %v252, 8.507059e+37
        %v254 = vand.u32 %v242, 2147483648
        %v255 = vor.u32 1.1754944e-38, %v254
        %v256 = vsel %vm253, %v255, %v251
        %v257 = vmul.f32 1.0, %v256
        %v258 = vperm.slane %v257, 0
        %v259 = vlaneseq
        %v260 = vshrl.u32 %v259, 7
        %262 = vset.pattern.permute.xlu0 %v260
        %263 = vperm.xlu0 %262, %v258
        %v264 = vpop.permute.xlu0 %263
        %v265 = vmul.f32 %v204, %v264
        %v266 = vmul.f32 %v205, %v264
        %267 = vst [vmem:[%s203] sm:$0xff] %v265
        %268 = vst [vmem:[%s203 + $0x8] sm:$0xff] %v266
        %s269 = sand.u32 %s97, 1
        %s270 = scalar_lea.sflag [#allocation4], %s269
        %s271 = sand.u32 %s97, 1
        %s272 = smul.addr %s271, 16
        %s273 = scalar_lea.vmem [#allocation7], %s272
        // Predicated region
        $region41: #{tpu_custom_call.1} parent=31 // pred_check
          %p274 = pneg %p107
        $region42: #{tpu_custom_call.1} parent=31 // pred_check_branch
          %276 = sbr.rel (%p274) target = $region44
        $region43: #{tpu_custom_call.1} parent=31 // pred_region
          %278 = vsyncadd %s270, 0
          %s279 = smul.addr %s21, 2
          %s280 = smul.addr %s279, 8
          %s281 = scalar_lea.hbm %s3, %s280
          %s283 = sshll.u32 %s273, 4
          %s284 = int_to_ptr.vmem [resolvable:$true] %s283
          %s285 = sshll.u32 %s281, 4
          %s286 = int_to_ptr.hbm [resolvable:$true] %s285
          %288 = dma.vmem_to_hbm [thread:$0]  %s284, 256, %s286, %s270
        $region44: #{tpu_custom_call.1} parent=31 // pred_fallthru
          _
      $region32: #{tpu_custom_call.1} parent=5 // pred_fallthru
        _
      %p289 = scmp.le.s32.totalorder 2, %s16
      // Predicated region
      $region45: #{tpu_custom_call.1} parent=5 // pred_check
        %p290 = pneg %p289
      $region46: #{tpu_custom_call.1} parent=5 // pred_check_branch
        %292 = sbr.rel (%p290) target = $region48
      $region47: #{tpu_custom_call.1} parent=5 // pred_region
        %s293 = ssub.s32 %s16, 2
        // Predicated region
        $region49: #{tpu_custom_call.1} parent=47 // pred_check
          %p294 = pneg %p113
        $region50: #{tpu_custom_call.1} parent=47 // pred_check_branch
          %296 = sbr.rel (%p294) target = $region52
        $region51: #{tpu_custom_call.1} parent=47 // pred_region
          %s297 = sand.u32 %s98, 1
          %s298 = scalar_lea.sflag [#allocation4], %s297
          %s299 = sand.u32 %s98, 1
          %s300 = smul.addr %s299, 16
          %s301 = scalar_lea.vmem [#allocation7], %s300
          %303 = dma.done %s298, 256
        $region52: #{tpu_custom_call.1} parent=47 // pred_fallthru
          _
      $region48: #{tpu_custom_call.1} parent=5 // pred_fallthru
        _
    $region6: #{tpu_custom_call.1} parent=1 // loop_footer
      %s20 = sadd.s32 1, %s16
    $region7: #{tpu_custom_call.1} parent=1 // loop_footer_branch
      %15 = sbr.rel target = $region3
    $region8: #{tpu_custom_call.1} parent=1 // loop_exit
      _
    %304 = vsyncpa [#allocation3], 1
    %s305 = scalar_lea.sflag [#allocation3], 1
    %306 = vsyncpa %s305, 1
    %307 = vsyncpa [#allocation6], 1
    %308 = vsyncpa [#allocation4], 1
    %s309 = scalar_lea.sflag [#allocation4], 1
    %310 = vsyncpa %s309, 1

</llo_original>
